<compile_context>
chip_gen: v6e
topology: v6e:2x2x1
jax: 0.10.0
libtpu: 0.0.40
codegen_flags: <defaults>
</compile_context>

<pallas_src>
import functools

import jax
import jax.numpy as jnp
from jax.experimental import pallas as pl
from jax.experimental.pallas import tpu as pltpu


def _round_up(n, m):
    return ((n + m - 1) // m) * m


def _make_mlp_kernel(tile_b, chunk_b):
    """Kernel closure: processes one (tile_b, D) batch block in chunk_b-row pieces."""
    assert tile_b % chunk_b == 0
    n_chunks = tile_b // chunk_b

    def kernel(x_ref, w1_ref, b1_ref, w2_ref, b2_ref, w3_ref, b3_ref, o_ref):
        # Weights / biases are small; load once per grid step (resident in VMEM).
        w1 = w1_ref[...]
        b1 = b1_ref[...]
        w2 = w2_ref[...]
        b2 = b2_ref[...]
        w3 = w3_ref[...]
        b3 = b3_ref[...]

        def compute_chunk(row0):
            x = x_ref[pl.ds(row0, chunk_b), :]                     # bf16 (chunk, D)
            # fc1 + ReLU (MXU matmul, f32 accumulate; bias/ReLU in f32)
            h1 = jnp.dot(x, w1, preferred_element_type=jnp.float32) + b1
            h1 = jnp.maximum(h1, 0.0)
            # fc2 + ReLU
            h2 = jnp.dot(h1.astype(w2.dtype), w2,
                         preferred_element_type=jnp.float32) + b2
            h2 = jnp.maximum(h2, 0.0)
            # fc3 (no activation)
            out = jnp.dot(h2.astype(w3.dtype), w3,
                          preferred_element_type=jnp.float32) + b3
            o_ref[pl.ds(row0, chunk_b), :] = out.astype(o_ref.dtype)

        if n_chunks == 1:
            compute_chunk(0)
        else:
            def body(c, carry):
                row0 = pl.multiple_of(c * chunk_b, chunk_b)
                compute_chunk(row0)
                return carry
            jax.lax.fori_loop(0, n_chunks, body, 0, unroll=True)

    return kernel


def tabular_nn_forward(x, params, *, tile_b=1024, chunk_b=256,
                       compute_dtype=jnp.bfloat16):
    """x: (B, D) float32.  params: dict of w1,b1,w2,b2,w3,b3 (w's are (in,out))."""
    w1, b1 = params["w1"], params["b1"]
    w2, b2 = params["w2"], params["b2"]
    w3, b3 = params["w3"], params["b3"]

    B, D = x.shape
    out_dim = w3.shape[1]

    # Choose a batch tile: large for streaming, but no bigger than the (padded)
    # batch.  Tile is always a multiple of chunk_b so the in-kernel chunk loop
    # divides it evenly, and B is padded to a multiple of the tile.
    assert tile_b % chunk_b == 0
    tile = min(tile_b, _round_up(B, chunk_b))
    b_pad = _round_up(B, tile)
    grid = (b_pad // tile,)

    if b_pad != B:
        x = jnp.pad(x, ((0, b_pad - B), (0, 0)))

    # bf16 inputs to the MXU; biases stay f32 (added on the f32 accumulator).
    x_c = x.astype(compute_dtype)
    w1_c = w1.astype(compute_dtype)
    w2_c = w2.astype(compute_dtype)
    w3_c = w3.astype(compute_dtype)

    kernel = _make_mlp_kernel(tile, min(chunk_b, tile))

    itemsize = jnp.dtype(compute_dtype).itemsize
    weight_bytes = (w1_c.size + w2_c.size + w3_c.size) * itemsize \
        + (b1.size + b2.size + b3.size) * 4
    cost = pl.CostEstimate(
        flops=2 * b_pad * (D * 64 + 64 * 32 + 32 * out_dim),
        transcendentals=0,
        bytes_accessed=b_pad * D * itemsize + b_pad * out_dim * 4 + weight_bytes,
    )

    const_spec = lambda shape: pl.BlockSpec(shape, lambda i: (0, 0))

    out = pl.pallas_call(
        kernel,
        out_shape=jax.ShapeDtypeStruct((b_pad, out_dim), jnp.float32),
        grid=grid,
        in_specs=[
            pl.BlockSpec((tile, D), lambda i: (i, 0)),   # x: streamed per tile
            const_spec(w1_c.shape), const_spec(b1.shape),
            const_spec(w2_c.shape), const_spec(b2.shape),
            const_spec(w3_c.shape), const_spec(b3.shape),
        ],
        out_specs=pl.BlockSpec((tile, out_dim), lambda i: (i, 0)),
        compiler_params=pltpu.CompilerParams(
            dimension_semantics=("parallel",)),   # both TCs on v7x, no-op elsewhere
        cost_estimate=cost,
    )(x_c, w1_c, b1, w2_c, b2, w3_c, b3)

    return out[:B]


def init_params(key, input_dim):
    """Deterministic init mimicking nn.Linear's U(-1/sqrt(fan_in), 1/sqrt(fan_in))."""
    dims = [(input_dim, 64), (64, 32), (32, 10)]
    params = {}
    for i, (fan_in, fan_out) in enumerate(dims, start=1):
        key, kw, kb = jax.random.split(key, 3)
        bound = 1.0 / jnp.sqrt(float(fan_in))
        params[f"w{i}"] = jax.random.uniform(
            kw, (fan_in, fan_out), jnp.float32, -bound, bound)
        params[f"b{i}"] = jax.random.uniform(
            kb, (1, fan_out), jnp.float32, -bound, bound)
    return params


def _reference_forward(x, p, compute_dtype=jnp.bfloat16):
    """Same math as the kernel: bf16 matmul inputs, f32 accumulation/bias/ReLU."""
    cd = compute_dtype
    h1 = jnp.maximum(
        jnp.dot(x.astype(cd), p["w1"].astype(cd),
                preferred_element_type=jnp.float32) + p["b1"], 0.0)
    h2 = jnp.maximum(
        jnp.dot(h1.astype(cd), p["w2"].astype(cd),
                preferred_element_type=jnp.float32) + p["b2"], 0.0)
    return jnp.dot(h2.astype(cd), p["w3"].astype(cd),
                   preferred_element_type=jnp.float32) + p["b3"]


if __name__ == "__main__":
    key = jax.random.PRNGKey(0)
    k_x, k_p = jax.random.split(key)

    batch, input_dim = 8, 32
    x = jax.random.normal(k_x, (batch, input_dim), jnp.float32)
    params = init_params(k_p, input_dim)

    fwd = jax.jit(functools.partial(tabular_nn_forward))
    out = jax.block_until_ready(fwd(x, params))

    ref = _reference_forward(x, params)
    assert out.shape == (batch, 10), out.shape
    assert jnp.allclose(out, ref, atol=1e-2, rtol=1e-2), "mismatch vs reference"

    print("KERNEL_OK")
</pallas_src>

<mosaic_0001>
module attributes {stable_mosaic.version = 11 : i64} {
  func.func @kernel(%arg0: i32, %arg1: memref<256x32xbf16, #tpu.memory_space<vmem>>, %arg2: memref<32x64xbf16, #tpu.memory_space<vmem>>, %arg3: memref<1x64xf32, #tpu.memory_space<vmem>>, %arg4: memref<64x32xbf16, #tpu.memory_space<vmem>>, %arg5: memref<1x32xf32, #tpu.memory_space<vmem>>, %arg6: memref<32x10xbf16, #tpu.memory_space<vmem>>, %arg7: memref<1x10xf32, #tpu.memory_space<vmem>>, %arg8: memref<256x10xf32, #tpu.memory_space<vmem>>) attributes {dimension_semantics = [#tpu.dimension_semantics<parallel>], iteration_bounds = array<i64: 1>, scalar_prefetch = 0 : i64, scratch_operands = 0 : i64, tpu.core_type = #tpu.core_type<tc>, window_params = [{transform_indices = @transform_0, window_bounds = array<i64: 256, 32>}, {pipeline_mode = #tpu.pipeline_mode<synchronous>, transform_indices = @transform_1, window_bounds = array<i64: 32, 64>}, {pipeline_mode = #tpu.pipeline_mode<synchronous>, transform_indices = @transform_2, window_bounds = array<i64: 1, 64>}, {pipeline_mode = #tpu.pipeline_mode<synchronous>, transform_indices = @transform_3, window_bounds = array<i64: 64, 32>}, {pipeline_mode = #tpu.pipeline_mode<synchronous>, transform_indices = @transform_4, window_bounds = array<i64: 1, 32>}, {pipeline_mode = #tpu.pipeline_mode<synchronous>, transform_indices = @transform_5, window_bounds = array<i64: 32, 10>}, {pipeline_mode = #tpu.pipeline_mode<synchronous>, transform_indices = @transform_6, window_bounds = array<i64: 1, 10>}, {transform_indices = @transform_7, window_bounds = array<i64: 256, 10>}]} {
    %c0 = arith.constant 0 : index
    %c0_0 = arith.constant 0 : index
    %0 = vector.load %arg2[%c0, %c0_0] : memref<32x64xbf16, #tpu.memory_space<vmem>>, vector<32x64xbf16>
    %c0_1 = arith.constant 0 : index
    %c0_2 = arith.constant 0 : index
    %1 = vector.load %arg3[%c0_1, %c0_2] : memref<1x64xf32, #tpu.memory_space<vmem>>, vector<1x64xf32>
    %c0_3 = arith.constant 0 : index
    %c0_4 = arith.constant 0 : index
    %2 = vector.load %arg4[%c0_3, %c0_4] : memref<64x32xbf16, #tpu.memory_space<vmem>>, vector<64x32xbf16>
    %c0_5 = arith.constant 0 : index
    %c0_6 = arith.constant 0 : index
    %3 = vector.load %arg5[%c0_5, %c0_6] : memref<1x32xf32, #tpu.memory_space<vmem>>, vector<1x32xf32>
    %c0_7 = arith.constant 0 : index
    %c0_8 = arith.constant 0 : index
    %4 = vector.load %arg6[%c0_7, %c0_8] : memref<32x10xbf16, #tpu.memory_space<vmem>>, vector<32x10xbf16>
    %c0_9 = arith.constant 0 : index
    %c0_10 = arith.constant 0 : index
    %5 = vector.load %arg7[%c0_9, %c0_10] : memref<1x10xf32, #tpu.memory_space<vmem>>, vector<1x10xf32>
    %c0_11 = arith.constant 0 : index
    %c0_12 = arith.constant 0 : index
    %6 = vector.load %arg1[%c0_11, %c0_12] : memref<256x32xbf16, #tpu.memory_space<vmem>>, vector<256x32xbf16>
    %cst = arith.constant dense<0.000000e+00> : vector<256x64xf32>
    %7 = tpu.matmul %6, %0, %cst {dimension_numbers = #tpu.dot_dimension_numbers<[1], [0], [0], [1], [0, 0, 1, 1], [], []>} : vector<256x32xbf16>, vector<32x64xbf16>, vector<256x64xf32> -> vector<256x64xf32>
    %8 = vector.broadcast %1 : vector<1x64xf32> to vector<256x64xf32>
    %9 = arith.addf %7, %8 : vector<256x64xf32>
    %cst_13 = arith.constant 0.000000e+00 : f32
    %10 = vector.broadcast %cst_13 : f32 to vector<256x64xf32>
    %11 = arith.maximumf %9, %10 : vector<256x64xf32>
    %12 = arith.truncf %11 : vector<256x64xf32> to vector<256x64xbf16>
    %cst_14 = arith.constant dense<0.000000e+00> : vector<256x32xf32>
    %13 = tpu.matmul %12, %2, %cst_14 {dimension_numbers = #tpu.dot_dimension_numbers<[1], [0], [0], [1], [0, 0, 1, 1], [], []>} : vector<256x64xbf16>, vector<64x32xbf16>, vector<256x32xf32> -> vector<256x32xf32>
    %14 = vector.broadcast %3 : vector<1x32xf32> to vector<256x32xf32>
    %15 = arith.addf %13, %14 : vector<256x32xf32>
    %cst_15 = arith.constant 0.000000e+00 : f32
    %16 = vector.broadcast %cst_15 : f32 to vector<256x32xf32>
    %17 = arith.maximumf %15, %16 : vector<256x32xf32>
    %18 = arith.truncf %17 : vector<256x32xf32> to vector<256x32xbf16>
    %cst_16 = arith.constant dense<0.000000e+00> : vector<256x10xf32>
    %19 = tpu.matmul %18, %4, %cst_16 {dimension_numbers = #tpu.dot_dimension_numbers<[1], [0], [0], [1], [0, 0, 1, 1], [], []>} : vector<256x32xbf16>, vector<32x10xbf16>, vector<256x10xf32> -> vector<256x10xf32>
    %20 = vector.broadcast %5 : vector<1x10xf32> to vector<256x10xf32>
    %21 = arith.addf %19, %20 : vector<256x10xf32>
    %c0_17 = arith.constant 0 : index
    %c0_18 = arith.constant 0 : index
    %22 = vector.load %arg8[%c0_17, %c0_18] : memref<256x10xf32, #tpu.memory_space<vmem>>, vector<256x10xf32>
    tpu.vector_store %arg8[%c0_17, %c0_18], %21 {strides = array<i32>} : memref<256x10xf32, #tpu.memory_space<vmem>>, vector<256x10xf32>,
    return
  }
  func.func @transform_0(%arg0: i32) -> (i32, i32) {
    %c0_i32 = arith.constant 0 : i32
    %c0_i32_0 = arith.constant 0 : i32
    return %arg0, %c0_i32 : i32, i32
  }
  func.func @transform_1(%arg0: i32) -> (i32, i32) {
    %c0_i32 = arith.constant 0 : i32
    %c0_i32_0 = arith.constant 0 : i32
    %c0_i32_1 = arith.constant 0 : i32
    return %c0_i32, %c0_i32_0 : i32, i32
  }
  func.func @transform_2(%arg0: i32) -> (i32, i32) {
    %c0_i32 = arith.constant 0 : i32
    %c0_i32_0 = arith.constant 0 : i32
    %c0_i32_1 = arith.constant 0 : i32
    return %c0_i32, %c0_i32_0 : i32, i32
  }
  func.func @transform_3(%arg0: i32) -> (i32, i32) {
    %c0_i32 = arith.constant 0 : i32
    %c0_i32_0 = arith.constant 0 : i32
    %c0_i32_1 = arith.constant 0 : i32
    return %c0_i32, %c0_i32_0 : i32, i32
  }
  func.func @transform_4(%arg0: i32) -> (i32, i32) {
    %c0_i32 = arith.constant 0 : i32
    %c0_i32_0 = arith.constant 0 : i32
    %c0_i32_1 = arith.constant 0 : i32
    return %c0_i32, %c0_i32_0 : i32, i32
  }
  func.func @transform_5(%arg0: i32) -> (i32, i32) {
    %c0_i32 = arith.constant 0 : i32
    %c0_i32_0 = arith.constant 0 : i32
    %c0_i32_1 = arith.constant 0 : i32
    return %c0_i32, %c0_i32_0 : i32, i32
  }
  func.func @transform_6(%arg0: i32) -> (i32, i32) {
    %c0_i32 = arith.constant 0 : i32
    %c0_i32_0 = arith.constant 0 : i32
    %c0_i32_1 = arith.constant 0 : i32
    return %c0_i32, %c0_i32_0 : i32, i32
  }
  func.func @transform_7(%arg0: i32) -> (i32, i32) {
    %c0_i32 = arith.constant 0 : i32
    %c0_i32_0 = arith.constant 0 : i32
    return %arg0, %c0_i32 : i32, i32
  }
}

</mosaic_0001>

<llo_original>
// kernel: tabular_nn_forward.1
$region0: #{tabular_nn_forward.1}
  #allocation0 [shape = 'u32[]', space=smem, size = 0x4, offset = 0x4, fixed_abs, tag = 'smem constant byte address 0x4 - core index']
  #allocation1 [shape = 'u32[144,128]{1,0:T(1,128)}', space=vmem, size = 0x12000, scoped, tag = 'internal scratch']
  %s0 = inlined_call_operand.vmem [shape: bf16[256,32], index: 0, kind: input, shape index: {}]
  %s1 = inlined_call_operand.vmem [shape: bf16[32,64], index: 1, kind: input, shape index: {}]
  %s2 = inlined_call_operand.vmem [shape: f32[1,64], index: 2, kind: input, shape index: {}]
  %s3 = inlined_call_operand.vmem [shape: bf16[64,32], index: 3, kind: input, shape index: {}]
  %s4 = inlined_call_operand.vmem [shape: f32[1,32], index: 4, kind: input, shape index: {}]
  %s5 = inlined_call_operand.vmem [shape: bf16[32,10], index: 5, kind: input, shape index: {}]
  %s6 = inlined_call_operand.vmem [shape: f32[1,10], index: 6, kind: input, shape index: {}]
  %s7 = inlined_call_operand.vmem [shape: f32[256,10], index: 7, kind: output, shape index: {}]
  %s8 = sld [smem:[#allocation0]]
  $region38: #{tabular_nn_forward.1} parent=0
    _
  %s10 = ssub.s32 1, %s8
  %s11 = scalar_select 0, %s10, %s8
  // Predicated region
  $region2: #{tabular_nn_forward.1} parent=0 // pred_check
    _
  $region3: #{tabular_nn_forward.1} parent=0 // pred_check_branch
    %13 = sbr.rel (0) target = $region5
  $region4: #{tabular_nn_forward.1} parent=0 // pred_region
    _
  $region5: #{tabular_nn_forward.1} parent=0 // pred_fallthru
    _
  // Predicated region
  $region6: #{tabular_nn_forward.1} parent=0 // pred_check
    _
  $region7: #{tabular_nn_forward.1} parent=0 // pred_check_branch
    %15 = sbr.rel (0) target = $region9
  $region8: #{tabular_nn_forward.1} parent=0 // pred_region
    _
  $region9: #{tabular_nn_forward.1} parent=0 // pred_fallthru
    _
  // Predicated region
  $region10: #{tabular_nn_forward.1} parent=0 // pred_check
    _
  $region11: #{tabular_nn_forward.1} parent=0 // pred_check_branch
    %17 = sbr.rel (0) target = $region13
  $region12: #{tabular_nn_forward.1} parent=0 // pred_region
    _
  $region13: #{tabular_nn_forward.1} parent=0 // pred_fallthru
    _
  // Predicated region
  $region14: #{tabular_nn_forward.1} parent=0 // pred_check
    _
  $region15: #{tabular_nn_forward.1} parent=0 // pred_check_branch
    %19 = sbr.rel (0) target = $region17
  $region16: #{tabular_nn_forward.1} parent=0 // pred_region
    _
  $region17: #{tabular_nn_forward.1} parent=0 // pred_fallthru
    _
  // Predicated region
  $region18: #{tabular_nn_forward.1} parent=0 // pred_check
    _
  $region19: #{tabular_nn_forward.1} parent=0 // pred_check_branch
    %21 = sbr.rel (0) target = $region21
  $region20: #{tabular_nn_forward.1} parent=0 // pred_region
    _
  $region21: #{tabular_nn_forward.1} parent=0 // pred_fallthru
    _
  // Predicated region
  $region22: #{tabular_nn_forward.1} parent=0 // pred_check
    _
  $region23: #{tabular_nn_forward.1} parent=0 // pred_check_branch
    %23 = sbr.rel (0) target = $region25
  $region24: #{tabular_nn_forward.1} parent=0 // pred_region
    _
  $region25: #{tabular_nn_forward.1} parent=0 // pred_fallthru
    _
  // Predicated region
  $region26: #{tabular_nn_forward.1} parent=0 // pred_check
    _
  $region27: #{tabular_nn_forward.1} parent=0 // pred_check_branch
    %25 = sbr.rel (0) target = $region29
  $region28: #{tabular_nn_forward.1} parent=0 // pred_region
    _
  $region29: #{tabular_nn_forward.1} parent=0 // pred_fallthru
    _
  %v27 = vld [vmem:[%s1] sm:$0xf]
  %v28 = vld [vmem:[%s1 + $0x4] sm:$0xf]
  %v29 = vld [vmem:[%s1 + $0x8] sm:$0xf]
  %v30 = vld [vmem:[%s1 + $0xc] sm:$0xf]
  %v31 = vld [vmem:[%s2] sm:$0x1]
  %v32 = vld [vmem:[%s3] sm:$0xf]
  %v33 = vld [vmem:[%s3 + $0x4] sm:$0xf]
  %v34 = vld [vmem:[%s3 + $0x8] sm:$0xf]
  %v35 = vld [vmem:[%s3 + $0xc] sm:$0xf]
  %v36 = vld [vmem:[%s3 + $0x10] sm:$0xf]
  %v37 = vld [vmem:[%s3 + $0x14] sm:$0xf]
  %v38 = vld [vmem:[%s3 + $0x18] sm:$0xf]
  %v39 = vld [vmem:[%s3 + $0x1c] sm:$0xf]
  %v40 = vld [vmem:[%s4] sm:$0x1]
  %v41 = vld [vmem:[%s5] sm:$0xf]
  %v42 = vld [vmem:[%s5 + $0x4] sm:$0xf]
  %v43 = vld [vmem:[%s5 + $0x8] sm:$0xf]
  %v44 = vld [vmem:[%s5 + $0xc] sm:$0xf]
  %v45 = vld [vmem:[%s6] sm:$0x1]
  %v46 = vld [vmem:[%s0] sm:$0xf]
  %v47 = vld [vmem:[%s0 + $0x4] sm:$0xf]
  %v48 = vld [vmem:[%s0 + $0x8] sm:$0xf]
  %v49 = vld [vmem:[%s0 + $0xc] sm:$0xf]
  %v50 = vld [vmem:[%s0 + $0x10] sm:$0xf]
  %v51 = vld [vmem:[%s0 + $0x14] sm:$0xf]
  %v52 = vld [vmem:[%s0 + $0x18] sm:$0xf]
  %v53 = vld [vmem:[%s0 + $0x1c] sm:$0xf]
  %v54 = vld [vmem:[%s0 + $0x20] sm:$0xf]
  %v55 = vld [vmem:[%s0 + $0x24] sm:$0xf]
  %v56 = vld [vmem:[%s0 + $0x28] sm:$0xf]
  %v57 = vld [vmem:[%s0 + $0x2c] sm:$0xf]
  %v58 = vld [vmem:[%s0 + $0x30] sm:$0xf]
  %v59 = vld [vmem:[%s0 + $0x34] sm:$0xf]
  %v60 = vld [vmem:[%s0 + $0x38] sm:$0xf]
  %v61 = vld [vmem:[%s0 + $0x3c] sm:$0xf]
  %v62 = vld [vmem:[%s0 + $0x40] sm:$0xf]
  %v63 = vld [vmem:[%s0 + $0x44] sm:$0xf]
  %v64 = vld [vmem:[%s0 + $0x48] sm:$0xf]
  %v65 = vld [vmem:[%s0 + $0x4c] sm:$0xf]
  %v66 = vld [vmem:[%s0 + $0x50] sm:$0xf]
  %v67 = vld [vmem:[%s0 + $0x54] sm:$0xf]
  %v68 = vld [vmem:[%s0 + $0x58] sm:$0xf]
  %v69 = vld [vmem:[%s0 + $0x5c] sm:$0xf]
  %v70 = vld [vmem:[%s0 + $0x60] sm:$0xf]
  %v71 = vld [vmem:[%s0 + $0x64] sm:$0xf]
  %v72 = vld [vmem:[%s0 + $0x68] sm:$0xf]
  %v73 = vld [vmem:[%s0 + $0x6c] sm:$0xf]
  %v74 = vld [vmem:[%s0 + $0x70] sm:$0xf]
  %v75 = vld [vmem:[%s0 + $0x74] sm:$0xf]
  %v76 = vld [vmem:[%s0 + $0x78] sm:$0xf]
  %v77 = vld [vmem:[%s0 + $0x7c] sm:$0xf]
  %v79 = vlaneseq
  %v80 = vshrl.u32 %v79, 7
  %v81 = vsub.s32 0, %v80
  %v82 = vrot.slane %v31, %v81
  %v116 = vunpack.c.l.b16 %v46
  %v117 = vunpack.c.l.b16 %v47
  %v118 = vunpack.c.l.b16 %v48
  %v119 = vunpack.c.l.b16 %v49
  %v120 = vunpack.c.l.b16 %v50
  %v121 = vunpack.c.l.b16 %v51
  %v122 = vunpack.c.l.b16 %v52
  %v123 = vunpack.c.l.b16 %v53
  %v124 = vunpack.c.l.b16 %v54
  %v125 = vunpack.c.l.b16 %v55
  %v126 = vunpack.c.l.b16 %v56
  %v127 = vunpack.c.l.b16 %v57
  %v128 = vunpack.c.l.b16 %v58
  %v129 = vunpack.c.l.b16 %v59
  %v130 = vunpack.c.l.b16 %v60
  %v131 = vunpack.c.l.b16 %v61
  %v132 = vunpack.c.l.b16 %v62
  %v133 = vunpack.c.l.b16 %v63
  %v134 = vunpack.c.l.b16 %v64
  %v135 = vunpack.c.l.b16 %v65
  %v136 = vunpack.c.l.b16 %v66
  %v137 = vunpack.c.l.b16 %v67
  %v138 = vunpack.c.l.b16 %v68
  %v139 = vunpack.c.l.b16 %v69
  %v140 = vunpack.c.l.b16 %v70
  %v141 = vunpack.c.l.b16 %v71
  %v142 = vunpack.c.l.b16 %v72
  %v143 = vunpack.c.l.b16 %v73
  %v144 = vunpack.c.l.b16 %v74
  %v145 = vunpack.c.l.b16 %v75
  %v146 = vunpack.c.l.b16 %v76
  %v147 = vunpack.c.l.b16 %v77
  %v148 = vpack.c.b16 %v117, %v116
  %v149 = vpack.c.b16 %v119, %v118
  %v150 = vpack.c.b16 %v121, %v120
  %v151 = vpack.c.b16 %v123, %v122
  %v152 = vpack.c.b16 %v125, %v124
  %v153 = vpack.c.b16 %v127, %v126
  %v154 = vpack.c.b16 %v129, %v128
  %v155 = vpack.c.b16 %v131, %v130
  %v156 = vpack.c.b16 %v133, %v132
  %v157 = vpack.c.b16 %v135, %v134
  %v158 = vpack.c.b16 %v137, %v136
  %v159 = vpack.c.b16 %v139, %v138
  %v160 = vpack.c.b16 %v141, %v140
  %v161 = vpack.c.b16 %v143, %v142
  %v162 = vpack.c.b16 %v145, %v144
  %v163 = vpack.c.b16 %v147, %v146
  %v168 = vunpack.c.l.b16 %v27
  %v169 = vunpack.c.l.b16 %v28
  %v170 = vunpack.c.l.b16 %v29
  %v171 = vunpack.c.l.b16 %v30
  %v172 = vpack.c.b16 %v169, %v168
  %v173 = vpack.c.b16 %v171, %v170
  %vm176 = vcmask 261120
  %v178 = vsel %vm176, %v148, 0
  %v181 = vsel %vm176, %v149, 0
  %v184 = vsel %vm176, %v150, 0
  %v187 = vsel %vm176, %v151, 0
  %v190 = vsel %vm176, %v152, 0
  %v193 = vsel %vm176, %v153, 0
  %v196 = vsel %vm176, %v154, 0
  %v199 = vsel %vm176, %v155, 0
  %v202 = vsel %vm176, %v156, 0
  %v205 = vsel %vm176, %v157, 0
  %v208 = vsel %vm176, %v158, 0
  %v211 = vsel %vm176, %v159, 0
  %v214 = vsel %vm176, %v160, 0
  %v217 = vsel %vm176, %v161, 0
  %v220 = vsel %vm176, %v162, 0
  %v223 = vsel %vm176, %v163, 0
  %225 = vmatprep.subr.bf16.mxu0 0
  %226 = vmatpush1.bf16.msra.mxu0 0
  %227 = vmatprep.subr.bf16.mxu0 0
  %228 = vmatpush1.bf16.msra.mxu0 0
  %229 = vmatprep.subr.bf16.mxu0 0
  %230 = vmatpush1.bf16.msra.mxu0 0
  %231 = vmatprep.subr.bf16.mxu0 0
  %232 = vmatpush1.bf16.msra.mxu0 0
  %233 = vmatprep.subr.bf16.mxu0 0
  %234 = vmatpush1.bf16.msra.mxu0 0
  %235 = vmatprep.subr.bf16.mxu0 0
  %236 = vmatpush1.bf16.msra.mxu0 0
  %237 = vmatprep.subr.bf16.mxu0 0
  %238 = vmatpush1.bf16.msra.mxu0 %v173
  %239 = vmatprep.subr.bf16.mxu0 0
  %240 = vmatpush1.bf16.msra.mxu0 %v172
  %241 = vmatprep.subr.bf16.mxu0 0
  %242 = vmatpush2.bf16.msra.mxu0 0
  %243 = vmatprep.subr.bf16.mxu0 0
  %244 = vmatpush2.bf16.msra.mxu0 0
  %245 = vmatprep.subr.bf16.mxu0 0
  %246 = vmatpush2.bf16.msra.mxu0 0
  %247 = vmatprep.subr.bf16.mxu0 0
  %248 = vmatpush2.bf16.msra.mxu0 0
  %249 = vmatprep.subr.bf16.mxu0 0
  %250 = vmatpush2.bf16.msra.mxu0 0
  %251 = vmatprep.subr.bf16.mxu0 0
  %252 = vmatpush2.bf16.msra.mxu0 0
  %253 = vmatprep.subr.bf16.mxu0 0
  %254 = vmatpush2.bf16.msra.mxu0 0
  %255 = vmatprep.subr.bf16.mxu0 0
  %256 = vmatpush2.bf16.msra.mxu0 0
  %257 = vmatprep.mubr.bf16.mxu0 0
  %258 = vmatmul.mubr.bf16.gmra.mxu0 %v178
  %v259 = vpop.f32.mrf.mxu0
  %v260 = vadd.f32 %v82, %v259
  %v261 = vpop.f32.mrf.mxu0
  %v262 = vpop.f32.mrf.mxu0
  %v263 = vadd.f32 %v82, %v262
  %v264 = vpop.f32.mrf.mxu0
  %265 = vmatprep.mubr.bf16.mxu0 0
  %266 = vmatmul.mubr.bf16.gmra.mxu0 %v181
  %v267 = vpop.f32.mrf.mxu0
  %v268 = vadd.f32 %v82, %v267
  %v269 = vpop.f32.mrf.mxu0
  %v270 = vpop.f32.mrf.mxu0
  %v271 = vadd.f32 %v82, %v270
  %v272 = vpop.f32.mrf.mxu0
  %273 = vmatprep.mubr.bf16.mxu0 0
  %274 = vmatmul.mubr.bf16.gmra.mxu0 %v184
  %v275 = vpop.f32.mrf.mxu0
  %v276 = vadd.f32 %v82, %v275
  %v277 = vpop.f32.mrf.mxu0
  %v278 = vpop.f32.mrf.mxu0
  %v279 = vadd.f32 %v82, %v278
  %v280 = vpop.f32.mrf.mxu0
  %281 = vmatprep.mubr.bf16.mxu0 0
  %282 = vmatmul.mubr.bf16.gmra.mxu0 %v187
  %v283 = vpop.f32.mrf.mxu0
  %v284 = vadd.f32 %v82, %v283
  %v285 = vpop.f32.mrf.mxu0
  %v286 = vpop.f32.mrf.mxu0
  %v287 = vadd.f32 %v82, %v286
  %v288 = vpop.f32.mrf.mxu0
  %289 = vmatprep.mubr.bf16.mxu0 0
  %290 = vmatmul.mubr.bf16.gmra.mxu0 %v190
  %v291 = vpop.f32.mrf.mxu0
  %v292 = vadd.f32 %v82, %v291
  %v293 = vpop.f32.mrf.mxu0
  %v294 = vpop.f32.mrf.mxu0
  %v295 = vadd.f32 %v82, %v294
  %v296 = vpop.f32.mrf.mxu0
  %297 = vmatprep.mubr.bf16.mxu0 0
  %298 = vmatmul.mubr.bf16.gmra.mxu0 %v193
  %v299 = vpop.f32.mrf.mxu0
  %v300 = vadd.f32 %v82, %v299
  %v301 = vpop.f32.mrf.mxu0
  %v302 = vpop.f32.mrf.mxu0
  %v303 = vadd.f32 %v82, %v302
  %v304 = vpop.f32.mrf.mxu0
  %305 = vmatprep.mubr.bf16.mxu0 0
  %306 = vmatmul.mubr.bf16.gmra.mxu0 %v196
  %v307 = vpop.f32.mrf.mxu0
  %v308 = vadd.f32 %v82, %v307
  %v309 = vpop.f32.mrf.mxu0
  %v310 = vpop.f32.mrf.mxu0
  %v311 = vadd.f32 %v82, %v310
  %v312 = vpop.f32.mrf.mxu0
  %313 = vmatprep.mubr.bf16.mxu0 0
  %314 = vmatmul.mubr.bf16.gmra.mxu0 %v199
  %v315 = vpop.f32.mrf.mxu0
  %v316 = vadd.f32 %v82, %v315
  %v317 = vpop.f32.mrf.mxu0
  %v318 = vpop.f32.mrf.mxu0
  %v319 = vadd.f32 %v82, %v318
  %v320 = vpop.f32.mrf.mxu0
  %321 = vmatprep.mubr.bf16.mxu0 0
  %322 = vmatmul.mubr.bf16.gmra.mxu0 %v202
  %v323 = vpop.f32.mrf.mxu0
  %v324 = vadd.f32 %v82, %v323
  %v325 = vpop.f32.mrf.mxu0
  %v326 = vpop.f32.mrf.mxu0
  %v327 = vadd.f32 %v82, %v326
  %v328 = vpop.f32.mrf.mxu0
  %329 = vmatprep.mubr.bf16.mxu0 0
  %330 = vmatmul.mubr.bf16.gmra.mxu0 %v205
  %v331 = vpop.f32.mrf.mxu0
  %v332 = vadd.f32 %v82, %v331
  %v333 = vpop.f32.mrf.mxu0
  %v334 = vpop.f32.mrf.mxu0
  %v335 = vadd.f32 %v82, %v334
  %v336 = vpop.f32.mrf.mxu0
  %337 = vmatprep.mubr.bf16.mxu0 0
  %338 = vmatmul.mubr.bf16.gmra.mxu0 %v208
  %v339 = vpop.f32.mrf.mxu0
  %v340 = vadd.f32 %v82, %v339
  %v341 = vpop.f32.mrf.mxu0
  %v342 = vpop.f32.mrf.mxu0
  %v343 = vadd.f32 %v82, %v342
  %v344 = vpop.f32.mrf.mxu0
  %345 = vmatprep.mubr.bf16.mxu0 0
  %346 = vmatmul.mubr.bf16.gmra.mxu0 %v211
  %v347 = vpop.f32.mrf.mxu0
  %v348 = vadd.f32 %v82, %v347
  %v349 = vpop.f32.mrf.mxu0
  %v350 = vpop.f32.mrf.mxu0
  %v351 = vadd.f32 %v82, %v350
  %v352 = vpop.f32.mrf.mxu0
  %353 = vmatprep.mubr.bf16.mxu0 0
  %354 = vmatmul.mubr.bf16.gmra.mxu0 %v214
  %v355 = vpop.f32.mrf.mxu0
  %v356 = vadd.f32 %v82, %v355
  %v357 = vpop.f32.mrf.mxu0
  %v358 = vpop.f32.mrf.mxu0
  %v359 = vadd.f32 %v82, %v358
  %v360 = vpop.f32.mrf.mxu0
  %361 = vmatprep.mubr.bf16.mxu0 0
  %362 = vmatmul.mubr.bf16.gmra.mxu0 %v217
  %v363 = vpop.f32.mrf.mxu0
  %v364 = vadd.f32 %v82, %v363
  %v365 = vpop.f32.mrf.mxu0
  %v366 = vpop.f32.mrf.mxu0
  %v367 = vadd.f32 %v82, %v366
  %v368 = vpop.f32.mrf.mxu0
  %369 = vmatprep.mubr.bf16.mxu0 0
  %370 = vmatmul.mubr.bf16.gmra.mxu0 %v220
  %v371 = vpop.f32.mrf.mxu0
  %v372 = vadd.f32 %v82, %v371
  %v373 = vpop.f32.mrf.mxu0
  %v374 = vpop.f32.mrf.mxu0
  %v375 = vadd.f32 %v82, %v374
  %v376 = vpop.f32.mrf.mxu0
  %377 = vmatprep.mubr.bf16.mxu0 0
  %378 = vmatmul.mubr.bf16.gmra.mxu0 %v223
  %v379 = vpop.f32.mrf.mxu0
  %v380 = vadd.f32 %v82, %v379
  %v381 = vpop.f32.mrf.mxu0
  %v382 = vpop.f32.mrf.mxu0
  %v383 = vadd.f32 %v82, %v382
  %v384 = vpop.f32.mrf.mxu0
  %385 = vdwg.mxu0
  %v386 = vmax.f32 %v260, 0.0
  %v387 = vmax.f32 %v263, 0.0
  %v388 = vmax.f32 %v268, 0.0
  %v389 = vmax.f32 %v271, 0.0
  %v390 = vmax.f32 %v276, 0.0
  %v391 = vmax.f32 %v279, 0.0
  %v392 = vmax.f32 %v284, 0.0
  %v393 = vmax.f32 %v287, 0.0
  %v394 = vmax.f32 %v292, 0.0
  %v395 = vmax.f32 %v295, 0.0
  %v396 = vmax.f32 %v300, 0.0
  %v397 = vmax.f32 %v303, 0.0
  %v398 = vmax.f32 %v308, 0.0
  %v399 = vmax.f32 %v311, 0.0
  %v400 = vmax.f32 %v316, 0.0
  %v401 = vmax.f32 %v319, 0.0
  %v402 = vmax.f32 %v324, 0.0
  %v403 = vmax.f32 %v327, 0.0
  %v404 = vmax.f32 %v332, 0.0
  %v405 = vmax.f32 %v335, 0.0
  %v406 = vmax.f32 %v340, 0.0
  %v407 = vmax.f32 %v343, 0.0
  %v408 = vmax.f32 %v348, 0.0
  %v409 = vmax.f32 %v351, 0.0
  %v410 = vmax.f32 %v356, 0.0
  %v411 = vmax.f32 %v359, 0.0
  %v412 = vmax.f32 %v364, 0.0
  %v413 = vmax.f32 %v367, 0.0
  %v414 = vmax.f32 %v372, 0.0
  %v415 = vmax.f32 %v375, 0.0
  %v416 = vmax.f32 %v380, 0.0
  %v417 = vmax.f32 %v383, 0.0
  %v418 = vpack.c.bf16 %v387, %v386
  %v419 = vpack.c.bf16 %v389, %v388
  %v420 = vpack.c.bf16 %v391, %v390
  %v421 = vpack.c.bf16 %v393, %v392
  %v422 = vpack.c.bf16 %v395, %v394
  %v423 = vpack.c.bf16 %v397, %v396
  %v424 = vpack.c.bf16 %v399, %v398
  %v425 = vpack.c.bf16 %v401, %v400
  %v426 = vpack.c.bf16 %v403, %v402
  %v427 = vpack.c.bf16 %v405, %v404
  %v428 = vpack.c.bf16 %v407, %v406
  %v429 = vpack.c.bf16 %v409, %v408
  %v430 = vpack.c.bf16 %v411, %v410
  %v431 = vpack.c.bf16 %v413, %v412
  %v432 = vpack.c.bf16 %v415, %v414
  %v433 = vpack.c.bf16 %v417, %v416
  %v435 = vlaneseq
  %v436 = vshrl.u32 %v435, 7
  %v437 = vsub.s32 0, %v436
  %v438 = vrot.slane %v40, %v437
  %v448 = vunpack.c.l.b16 %v32
  %v449 = vunpack.c.l.b16 %v33
  %v450 = vunpack.c.l.b16 %v34
  %v451 = vunpack.c.l.b16 %v35
  %v452 = vunpack.c.l.b16 %v36
  %v453 = vunpack.c.l.b16 %v37
  %v454 = vunpack.c.l.b16 %v38
  %v455 = vunpack.c.l.b16 %v39
  %v456 = vpack.c.b16 %v449, %v448
  %v457 = vpack.c.b16 %v451, %v450
  %v458 = vpack.c.b16 %v453, %v452
  %v459 = vpack.c.b16 %v455, %v454
  %vm464 = vcmask 523264
  %v466 = vsel %vm464, %v418, 0
  %v469 = vsel %vm464, %v419, 0
  %v472 = vsel %vm464, %v420, 0
  %v475 = vsel %vm464, %v421, 0
  %v478 = vsel %vm464, %v422, 0
  %v481 = vsel %vm464, %v423, 0
  %v484 = vsel %vm464, %v424, 0
  %v487 = vsel %vm464, %v425, 0
  %v490 = vsel %vm464, %v426, 0
  %v493 = vsel %vm464, %v427, 0
  %v496 = vsel %vm464, %v428, 0
  %v499 = vsel %vm464, %v429, 0
  %v502 = vsel %vm464, %v430, 0
  %v505 = vsel %vm464, %v431, 0
  %v508 = vsel %vm464, %v432, 0
  %v511 = vsel %vm464, %v433, 0
  %513 = vmatprep.subr.bf16.mxu0 0
  %514 = vmatpush1.bf16.msra.mxu0 0
  %515 = vmatprep.subr.bf16.mxu0 0
  %516 = vmatpush1.bf16.msra.mxu0 0
  %517 = vmatprep.subr.bf16.mxu0 0
  %518 = vmatpush1.bf16.msra.mxu0 0
  %519 = vmatprep.subr.bf16.mxu0 0
  %520 = vmatpush1.bf16.msra.mxu0 0
  %521 = vmatprep.subr.bf16.mxu0 0
  %522 = vmatpush1.bf16.msra.mxu0 %v459
  %523 = vmatprep.subr.bf16.mxu0 0
  %524 = vmatpush1.bf16.msra.mxu0 %v458
  %525 = vmatprep.subr.bf16.mxu0 0
  %526 = vmatpush1.bf16.msra.mxu0 %v457
  %527 = vmatprep.subr.bf16.mxu0 0
  %528 = vmatpush1.bf16.msra.mxu0 %v456
  %529 = vmatprep.subr.bf16.mxu0 0
  %530 = vmatpush2.bf16.msra.mxu0 0
  %531 = vmatprep.subr.bf16.mxu0 0
  %532 = vmatpush2.bf16.msra.mxu0 0
  %533 = vmatprep.subr.bf16.mxu0 0
  %534 = vmatpush2.bf16.msra.mxu0 0
  %535 = vmatprep.subr.bf16.mxu0 0
  %536 = vmatpush2.bf16.msra.mxu0 0
  %537 = vmatprep.subr.bf16.mxu0 0
  %538 = vmatpush2.bf16.msra.mxu0 0
  %539 = vmatprep.subr.bf16.mxu0 0
  %540 = vmatpush2.bf16.msra.mxu0 0
  %541 = vmatprep.subr.bf16.mxu0 0
  %542 = vmatpush2.bf16.msra.mxu0 0
  %543 = vmatprep.subr.bf16.mxu0 0
  %544 = vmatpush2.bf16.msra.mxu0 0
  %545 = vmatprep.mubr.bf16.mxu0 0
  %546 = vmatmul.mubr.bf16.gmra.mxu0 %v466
  %v547 = vpop.f32.mrf.mxu0
  %v548 = vadd.f32 %v438, %v547
  %v549 = vpop.f32.mrf.mxu0
  %v550 = vpop.f32.mrf.mxu0
  %v551 = vadd.f32 %v438, %v550
  %v552 = vpop.f32.mrf.mxu0
  %553 = vmatprep.mubr.bf16.mxu0 0
  %554 = vmatmul.mubr.bf16.gmra.mxu0 %v469
  %v555 = vpop.f32.mrf.mxu0
  %v556 = vadd.f32 %v438, %v555
  %v557 = vpop.f32.mrf.mxu0
  %v558 = vpop.f32.mrf.mxu0
  %v559 = vadd.f32 %v438, %v558
  %v560 = vpop.f32.mrf.mxu0
  %561 = vmatprep.mubr.bf16.mxu0 0
  %562 = vmatmul.mubr.bf16.gmra.mxu0 %v472
  %v563 = vpop.f32.mrf.mxu0
  %v564 = vadd.f32 %v438, %v563
  %v565 = vpop.f32.mrf.mxu0
  %v566 = vpop.f32.mrf.mxu0
  %v567 = vadd.f32 %v438, %v566
  %v568 = vpop.f32.mrf.mxu0
  %569 = vmatprep.mubr.bf16.mxu0 0
  %570 = vmatmul.mubr.bf16.gmra.mxu0 %v475
  %v571 = vpop.f32.mrf.mxu0
  %v572 = vadd.f32 %v438, %v571
  %v573 = vpop.f32.mrf.mxu0
  %v574 = vpop.f32.mrf.mxu0
  %v575 = vadd.f32 %v438, %v574
  %v576 = vpop.f32.mrf.mxu0
  %577 = vmatprep.mubr.bf16.mxu0 0
  %578 = vmatmul.mubr.bf16.gmra.mxu0 %v478
  %v579 = vpop.f32.mrf.mxu0
  %v580 = vadd.f32 %v438, %v579
  %v581 = vpop.f32.mrf.mxu0
  %v582 = vpop.f32.mrf.mxu0
  %v583 = vadd.f32 %v438, %v582
  %v584 = vpop.f32.mrf.mxu0
  %585 = vmatprep.mubr.bf16.mxu0 0
  %586 = vmatmul.mubr.bf16.gmra.mxu0 %v481
  %v587 = vpop.f32.mrf.mxu0
  %v588 = vadd.f32 %v438, %v587
  %v589 = vpop.f32.mrf.mxu0
  %v590 = vpop.f32.mrf.mxu0
  %v591 = vadd.f32 %v438, %v590
  %v592 = vpop.f32.mrf.mxu0
  %593 = vmatprep.mubr.bf16.mxu0 0
  %594 = vmatmul.mubr.bf16.gmra.mxu0 %v484
  %v595 = vpop.f32.mrf.mxu0
  %v596 = vadd.f32 %v438, %v595
  %v597 = vpop.f32.mrf.mxu0
  %v598 = vpop.f32.mrf.mxu0
  %v599 = vadd.f32 %v438, %v598
  %v600 = vpop.f32.mrf.mxu0
  %601 = vmatprep.mubr.bf16.mxu0 0
  %602 = vmatmul.mubr.bf16.gmra.mxu0 %v487
  %v603 = vpop.f32.mrf.mxu0
  %v604 = vadd.f32 %v438, %v603
  %v605 = vpop.f32.mrf.mxu0
  %v606 = vpop.f32.mrf.mxu0
  %v607 = vadd.f32 %v438, %v606
  %v608 = vpop.f32.mrf.mxu0
  %609 = vmatprep.mubr.bf16.mxu0 0
  %610 = vmatmul.mubr.bf16.gmra.mxu0 %v490
  %v611 = vpop.f32.mrf.mxu0
  %v612 = vadd.f32 %v438, %v611
  %v613 = vpop.f32.mrf.mxu0
  %v614 = vpop.f32.mrf.mxu0
  %v615 = vadd.f32 %v438, %v614
  %v616 = vpop.f32.mrf.mxu0
  %617 = vmatprep.mubr.bf16.mxu0 0
  %618 = vmatmul.mubr.bf16.gmra.mxu0 %v493
  %v619 = vpop.f32.mrf.mxu0
  %v620 = vadd.f32 %v438, %v619
  %v621 = vpop.f32.mrf.mxu0
  %v622 = vpop.f32.mrf.mxu0
  %v623 = vadd.f32 %v438, %v622
  %v624 = vpop.f32.mrf.mxu0
  %625 = vmatprep.mubr.bf16.mxu0 0
  %626 = vmatmul.mubr.bf16.gmra.mxu0 %v496
  %v627 = vpop.f32.mrf.mxu0
  %v628 = vadd.f32 %v438, %v627
  %v629 = vpop.f32.mrf.mxu0
  %v630 = vpop.f32.mrf.mxu0
  %v631 = vadd.f32 %v438, %v630
  %v632 = vpop.f32.mrf.mxu0
  %633 = vmatprep.mubr.bf16.mxu0 0
  %634 = vmatmul.mubr.bf16.gmra.mxu0 %v499
  %v635 = vpop.f32.mrf.mxu0
  %v636 = vadd.f32 %v438, %v635
  %v637 = vpop.f32.mrf.mxu0
  %v638 = vpop.f32.mrf.mxu0
  %v639 = vadd.f32 %v438, %v638
  %v640 = vpop.f32.mrf.mxu0
  %641 = vmatprep.mubr.bf16.mxu0 0
  %642 = vmatmul.mubr.bf16.gmra.mxu0 %v502
  %v643 = vpop.f32.mrf.mxu0
  %v644 = vadd.f32 %v438, %v643
  %v645 = vpop.f32.mrf.mxu0
  %v646 = vpop.f32.mrf.mxu0
  %v647 = vadd.f32 %v438, %v646
  %v648 = vpop.f32.mrf.mxu0
  %649 = vmatprep.mubr.bf16.mxu0 0
  %650 = vmatmul.mubr.bf16.gmra.mxu0 %v505
  %v651 = vpop.f32.mrf.mxu0
  %v652 = vadd.f32 %v438, %v651
  %v653 = vpop.f32.mrf.mxu0
  %v654 = vpop.f32.mrf.mxu0
  %v655 = vadd.f32 %v438, %v654
  %v656 = vpop.f32.mrf.mxu0
  %657 = vmatprep.mubr.bf16.mxu0 0
  %658 = vmatmul.mubr.bf16.gmra.mxu0 %v508
  %v659 = vpop.f32.mrf.mxu0
  %v660 = vadd.f32 %v438, %v659
  %v661 = vpop.f32.mrf.mxu0
  %v662 = vpop.f32.mrf.mxu0
  %v663 = vadd.f32 %v438, %v662
  %v664 = vpop.f32.mrf.mxu0
  %665 = vmatprep.mubr.bf16.mxu0 0
  %666 = vmatmul.mubr.bf16.gmra.mxu0 %v511
  %v667 = vpop.f32.mrf.mxu0
  %v668 = vadd.f32 %v438, %v667
  %v669 = vpop.f32.mrf.mxu0
  %v670 = vpop.f32.mrf.mxu0
  %v671 = vadd.f32 %v438, %v670
  %v672 = vpop.f32.mrf.mxu0
  %673 = vdwg.mxu0
  %v674 = vmax.f32 %v548, 0.0
  %v675 = vmax.f32 %v551, 0.0
  %v676 = vmax.f32 %v556, 0.0
  %v677 = vmax.f32 %v559, 0.0
  %v678 = vmax.f32 %v564, 0.0
  %v679 = vmax.f32 %v567, 0.0
  %v680 = vmax.f32 %v572, 0.0
  %v681 = vmax.f32 %v575, 0.0
  %v682 = vmax.f32 %v580, 0.0
  %v683 = vmax.f32 %v583, 0.0
  %v684 = vmax.f32 %v588, 0.0
  %v685 = vmax.f32 %v591, 0.0
  %v686 = vmax.f32 %v596, 0.0
  %v687 = vmax.f32 %v599, 0.0
  %v688 = vmax.f32 %v604, 0.0
  %v689 = vmax.f32 %v607, 0.0
  %v690 = vmax.f32 %v612, 0.0
  %v691 = vmax.f32 %v615, 0.0
  %v692 = vmax.f32 %v620, 0.0
  %v693 = vmax.f32 %v623, 0.0
  %v694 = vmax.f32 %v628, 0.0
  %v695 = vmax.f32 %v631, 0.0
  %v696 = vmax.f32 %v636, 0.0
  %v697 = vmax.f32 %v639, 0.0
  %v698 = vmax.f32 %v644, 0.0
  %v699 = vmax.f32 %v647, 0.0
  %v700 = vmax.f32 %v652, 0.0
  %v701 = vmax.f32 %v655, 0.0
  %v702 = vmax.f32 %v660, 0.0
  %v703 = vmax.f32 %v663, 0.0
  %v704 = vmax.f32 %v668, 0.0
  %v705 = vmax.f32 %v671, 0.0
  %v706 = vpack.c.bf16 %v675, %v674
  %v707 = vpack.c.bf16 %v677, %v676
  %v708 = vpack.c.bf16 %v679, %v678
  %v709 = vpack.c.bf16 %v681, %v680
  %v710 = vpack.c.bf16 %v683, %v682
  %v711 = vpack.c.bf16 %v685, %v684
  %v712 = vpack.c.bf16 %v687, %v686
  %v713 = vpack.c.bf16 %v689, %v688
  %v714 = vpack.c.bf16 %v691, %v690
  %v715 = vpack.c.bf16 %v693, %v692
  %v716 = vpack.c.bf16 %v695, %v694
  %v717 = vpack.c.bf16 %v697, %v696
  %v718 = vpack.c.bf16 %v699, %v698
  %v719 = vpack.c.bf16 %v701, %v700
  %v720 = vpack.c.bf16 %v703, %v702
  %v721 = vpack.c.bf16 %v705, %v704
  %v723 = vlaneseq
  %v724 = vshrl.u32 %v723, 7
  %v725 = vsub.s32 0, %v724
  %v726 = vrot.slane %v45, %v725
  %v732 = vunpack.c.l.b16 %v41
  %v733 = vunpack.c.l.b16 %v42
  %v734 = vunpack.c.l.b16 %v43
  %v735 = vunpack.c.l.b16 %v44
  %v736 = vpack.c.b16 %v733, %v732
  %v737 = vpack.c.b16 %v735, %v734
  %v741 = vsel %vm176, %v706, 0
  %v744 = vsel %vm176, %v707, 0
  %v747 = vsel %vm176, %v708, 0
  %v750 = vsel %vm176, %v709, 0
  %v753 = vsel %vm176, %v710, 0
  %v756 = vsel %vm176, %v711, 0
  %v759 = vsel %vm176, %v712, 0
  %v762 = vsel %vm176, %v713, 0
  %v765 = vsel %vm176, %v714, 0
  %v768 = vsel %vm176, %v715, 0
  %v771 = vsel %vm176, %v716, 0
  %v774 = vsel %vm176, %v717, 0
  %v777 = vsel %vm176, %v718, 0
  %v780 = vsel %vm176, %v719, 0
  %v783 = vsel %vm176, %v720, 0
  %v786 = vsel %vm176, %v721, 0
  %788 = vmatprep.subr.bf16.mxu0 0
  %789 = vmatpush1.bf16.msra.mxu0 0
  %790 = vmatprep.subr.bf16.mxu0 0
  %791 = vmatpush1.bf16.msra.mxu0 0
  %792 = vmatprep.subr.bf16.mxu0 0
  %793 = vmatpush1.bf16.msra.mxu0 0
  %794 = vmatprep.subr.bf16.mxu0 0
  %795 = vmatpush1.bf16.msra.mxu0 0
  %796 = vmatprep.subr.bf16.mxu0 0
  %797 = vmatpush1.bf16.msra.mxu0 0
  %798 = vmatprep.subr.bf16.mxu0 0
  %799 = vmatpush1.bf16.msra.mxu0 0
  %800 = vmatprep.subr.bf16.mxu0 0
  %801 = vmatpush1.bf16.msra.mxu0 %v737
  %802 = vmatprep.subr.bf16.mxu0 0
  %803 = vmatpush1.bf16.msra.mxu0 %v736
  %804 = vmatprep.subr.bf16.mxu0 0
  %805 = vmatpush2.bf16.msra.mxu0 0
  %806 = vmatprep.subr.bf16.mxu0 0
  %807 = vmatpush2.bf16.msra.mxu0 0
  %808 = vmatprep.subr.bf16.mxu0 0
  %809 = vmatpush2.bf16.msra.mxu0 0
  %810 = vmatprep.subr.bf16.mxu0 0
  %811 = vmatpush2.bf16.msra.mxu0 0
  %812 = vmatprep.subr.bf16.mxu0 0
  %813 = vmatpush2.bf16.msra.mxu0 0
  %814 = vmatprep.subr.bf16.mxu0 0
  %815 = vmatpush2.bf16.msra.mxu0 0
  %816 = vmatprep.subr.bf16.mxu0 0
  %817 = vmatpush2.bf16.msra.mxu0 0
  %818 = vmatprep.subr.bf16.mxu0 0
  %819 = vmatpush2.bf16.msra.mxu0 0
  %820 = vmatprep.mubr.bf16.mxu0 0
  %821 = vmatmul.mubr.bf16.gmra.mxu0 %v741
  %v822 = vpop.f32.mrf.mxu0
  %v823 = vadd.f32 %v726, %v822
  %v824 = vpop.f32.mrf.mxu0
  %v825 = vpop.f32.mrf.mxu0
  %v826 = vadd.f32 %v726, %v825
  %v827 = vpop.f32.mrf.mxu0
  %828 = vmatprep.mubr.bf16.mxu0 0
  %829 = vmatmul.mubr.bf16.gmra.mxu0 %v744
  %v830 = vpop.f32.mrf.mxu0
  %v831 = vadd.f32 %v726, %v830
  %v832 = vpop.f32.mrf.mxu0
  %v833 = vpop.f32.mrf.mxu0
  %v834 = vadd.f32 %v726, %v833
  %v835 = vpop.f32.mrf.mxu0
  %836 = vmatprep.mubr.bf16.mxu0 0
  %837 = vmatmul.mubr.bf16.gmra.mxu0 %v747
  %v838 = vpop.f32.mrf.mxu0
  %v839 = vadd.f32 %v726, %v838
  %v840 = vpop.f32.mrf.mxu0
  %v841 = vpop.f32.mrf.mxu0
  %v842 = vadd.f32 %v726, %v841
  %v843 = vpop.f32.mrf.mxu0
  %844 = vmatprep.mubr.bf16.mxu0 0
  %845 = vmatmul.mubr.bf16.gmra.mxu0 %v750
  %v846 = vpop.f32.mrf.mxu0
  %v847 = vadd.f32 %v726, %v846
  %v848 = vpop.f32.mrf.mxu0
  %v849 = vpop.f32.mrf.mxu0
  %v850 = vadd.f32 %v726, %v849
  %v851 = vpop.f32.mrf.mxu0
  %852 = vmatprep.mubr.bf16.mxu0 0
  %853 = vmatmul.mubr.bf16.gmra.mxu0 %v753
  %v854 = vpop.f32.mrf.mxu0
  %v855 = vadd.f32 %v726, %v854
  %v856 = vpop.f32.mrf.mxu0
  %v857 = vpop.f32.mrf.mxu0
  %v858 = vadd.f32 %v726, %v857
  %v859 = vpop.f32.mrf.mxu0
  %860 = vmatprep.mubr.bf16.mxu0 0
  %861 = vmatmul.mubr.bf16.gmra.mxu0 %v756
  %v862 = vpop.f32.mrf.mxu0
  %v863 = vadd.f32 %v726, %v862
  %v864 = vpop.f32.mrf.mxu0
  %v865 = vpop.f32.mrf.mxu0
  %v866 = vadd.f32 %v726, %v865
  %v867 = vpop.f32.mrf.mxu0
  %868 = vmatprep.mubr.bf16.mxu0 0
  %869 = vmatmul.mubr.bf16.gmra.mxu0 %v759
  %v870 = vpop.f32.mrf.mxu0
  %v871 = vadd.f32 %v726, %v870
  %v872 = vpop.f32.mrf.mxu0
  %v873 = vpop.f32.mrf.mxu0
  %v874 = vadd.f32 %v726, %v873
  %v875 = vpop.f32.mrf.mxu0
  %876 = vmatprep.mubr.bf16.mxu0 0
  %877 = vmatmul.mubr.bf16.gmra.mxu0 %v762
  %v878 = vpop.f32.mrf.mxu0
  %v879 = vadd.f32 %v726, %v878
  %v880 = vpop.f32.mrf.mxu0
  %v881 = vpop.f32.mrf.mxu0
  %v882 = vadd.f32 %v726, %v881
  %v883 = vpop.f32.mrf.mxu0
  %884 = vmatprep.mubr.bf16.mxu0 0
  %885 = vmatmul.mubr.bf16.gmra.mxu0 %v765
  %v886 = vpop.f32.mrf.mxu0
  %v887 = vadd.f32 %v726, %v886
  %v888 = vpop.f32.mrf.mxu0
  %v889 = vpop.f32.mrf.mxu0
  %v890 = vadd.f32 %v726, %v889
  %v891 = vpop.f32.mrf.mxu0
  %892 = vmatprep.mubr.bf16.mxu0 0
  %893 = vmatmul.mubr.bf16.gmra.mxu0 %v768
  %v894 = vpop.f32.mrf.mxu0
  %v895 = vadd.f32 %v726, %v894
  %v896 = vpop.f32.mrf.mxu0
  %v897 = vpop.f32.mrf.mxu0
  %v898 = vadd.f32 %v726, %v897
  %v899 = vpop.f32.mrf.mxu0
  %900 = vmatprep.mubr.bf16.mxu0 0
  %901 = vmatmul.mubr.bf16.gmra.mxu0 %v771
  %v902 = vpop.f32.mrf.mxu0
  %v903 = vadd.f32 %v726, %v902
  %v904 = vpop.f32.mrf.mxu0
  %v905 = vpop.f32.mrf.mxu0
  %v906 = vadd.f32 %v726, %v905
  %v907 = vpop.f32.mrf.mxu0
  %908 = vmatprep.mubr.bf16.mxu0 0
  %909 = vmatmul.mubr.bf16.gmra.mxu0 %v774
  %v910 = vpop.f32.mrf.mxu0
  %v911 = vadd.f32 %v726, %v910
  %v912 = vpop.f32.mrf.mxu0
  %v913 = vpop.f32.mrf.mxu0
  %v914 = vadd.f32 %v726, %v913
  %v915 = vpop.f32.mrf.mxu0
  %916 = vmatprep.mubr.bf16.mxu0 0
  %917 = vmatmul.mubr.bf16.gmra.mxu0 %v777
  %v918 = vpop.f32.mrf.mxu0
  %v919 = vadd.f32 %v726, %v918
  %v920 = vpop.f32.mrf.mxu0
  %v921 = vpop.f32.mrf.mxu0
  %v922 = vadd.f32 %v726, %v921
  %v923 = vpop.f32.mrf.mxu0
  %924 = vmatprep.mubr.bf16.mxu0 0
  %925 = vmatmul.mubr.bf16.gmra.mxu0 %v780
  %v926 = vpop.f32.mrf.mxu0
  %v927 = vadd.f32 %v726, %v926
  %v928 = vpop.f32.mrf.mxu0
  %v929 = vpop.f32.mrf.mxu0
  %v930 = vadd.f32 %v726, %v929
  %v931 = vpop.f32.mrf.mxu0
  %932 = vmatprep.mubr.bf16.mxu0 0
  %933 = vmatmul.mubr.bf16.gmra.mxu0 %v783
  %v934 = vpop.f32.mrf.mxu0
  %v935 = vadd.f32 %v726, %v934
  %v936 = vpop.f32.mrf.mxu0
  %v937 = vpop.f32.mrf.mxu0
  %v938 = vadd.f32 %v726, %v937
  %v939 = vpop.f32.mrf.mxu0
  %940 = vmatprep.mubr.bf16.mxu0 0
  %941 = vmatmul.mubr.bf16.gmra.mxu0 %v786
  %v942 = vpop.f32.mrf.mxu0
  %v943 = vadd.f32 %v726, %v942
  %v944 = vpop.f32.mrf.mxu0
  %v945 = vpop.f32.mrf.mxu0
  %v946 = vadd.f32 %v726, %v945
  %v947 = vpop.f32.mrf.mxu0
  %948 = vdwg.mxu0
  %vm949 = vcmask 80896
  %950 = vst.msk [vmem:[%s7] sm:$0xff] %vm949, %v823
  %951 = vst.msk [vmem:[%s7 + $0x8] sm:$0xff] %vm949, %v826
  %952 = vst.msk [vmem:[%s7 + $0x10] sm:$0xff] %vm949, %v831
  %953 = vst.msk [vmem:[%s7 + $0x18] sm:$0xff] %vm949, %v834
  %954 = vst.msk [vmem:[%s7 + $0x20] sm:$0xff] %vm949, %v839
  %955 = vst.msk [vmem:[%s7 + $0x28] sm:$0xff] %vm949, %v842
  %956 = vst.msk [vmem:[%s7 + $0x30] sm:$0xff] %vm949, %v847
  %957 = vst.msk [vmem:[%s7 + $0x38] sm:$0xff] %vm949, %v850
  %958 = vst.msk [vmem:[%s7 + $0x40] sm:$0xff] %vm949, %v855
  %959 = vst.msk [vmem:[%s7 + $0x48] sm:$0xff] %vm949, %v858
  %960 = vst.msk [vmem:[%s7 + $0x50] sm:$0xff] %vm949, %v863
  %961 = vst.msk [vmem:[%s7 + $0x58] sm:$0xff] %vm949, %v866
  %962 = vst.msk [vmem:[%s7 + $0x60] sm:$0xff] %vm949, %v871
  %963 = vst.msk [vmem:[%s7 + $0x68] sm:$0xff] %vm949, %v874
  %964 = vst.msk [vmem:[%s7 + $0x70] sm:$0xff] %vm949, %v879
  %965 = vst.msk [vmem:[%s7 + $0x78] sm:$0xff] %vm949, %v882
  %966 = vst.msk [vmem:[%s7 + $0x80] sm:$0xff] %vm949, %v887
  %967 = vst.msk [vmem:[%s7 + $0x88] sm:$0xff] %vm949, %v890
  %968 = vst.msk [vmem:[%s7 + $0x90] sm:$0xff] %vm949, %v895
  %969 = vst.msk [vmem:[%s7 + $0x98] sm:$0xff] %vm949, %v898
  %970 = vst.msk [vmem:[%s7 + $0xa0] sm:$0xff] %vm949, %v903
  %971 = vst.msk [vmem:[%s7 + $0xa8] sm:$0xff] %vm949, %v906
  %972 = vst.msk [vmem:[%s7 + $0xb0] sm:$0xff] %vm949, %v911
  %973 = vst.msk [vmem:[%s7 + $0xb8] sm:$0xff] %vm949, %v914
  %974 = vst.msk [vmem:[%s7 + $0xc0] sm:$0xff] %vm949, %v919
  %975 = vst.msk [vmem:[%s7 + $0xc8] sm:$0xff] %vm949, %v922
  %976 = vst.msk [vmem:[%s7 + $0xd0] sm:$0xff] %vm949, %v927
  %977 = vst.msk [vmem:[%s7 + $0xd8] sm:$0xff] %vm949, %v930
  %978 = vst.msk [vmem:[%s7 + $0xe0] sm:$0xff] %vm949, %v935
  %979 = vst.msk [vmem:[%s7 + $0xe8] sm:$0xff] %vm949, %v938
  %980 = vst.msk [vmem:[%s7 + $0xf0] sm:$0xff] %vm949, %v943
  %981 = vst.msk [vmem:[%s7 + $0xf8] sm:$0xff] %vm949, %v946
  // Predicated region
  $region30: #{tabular_nn_forward.1} parent=0 // pred_check
    _
  $region31: #{tabular_nn_forward.1} parent=0 // pred_check_branch
    %983 = sbr.rel (0) target = $region33
  $region32: #{tabular_nn_forward.1} parent=0 // pred_region
    _
  $region33: #{tabular_nn_forward.1} parent=0 // pred_fallthru
    _
  // Predicated region
  $region34: #{tabular_nn_forward.1} parent=0 // pred_check
    _
  $region35: #{tabular_nn_forward.1} parent=0 // pred_check_branch
    %985 = sbr.rel (0) target = $region37
  $region36: #{tabular_nn_forward.1} parent=0 // pred_region
    _
  $region37: #{tabular_nn_forward.1} parent=0 // pred_fallthru
    _

</llo_original>
